<compile_context>
chip_gen: v7x
topology: tpu7x:2x2x1
jax: 0.10.0
libtpu: 0.0.40
codegen_flags: <defaults>
</compile_context>

<pallas_src>
import math
from functools import partial

import jax
import jax.numpy as jnp
from jax import lax
from jax.experimental import pallas as pl
from jax.experimental.pallas import tpu as pltpu

_VMEM_LIMIT = 48 * 1024 * 1024  # fits under v7x's 64 MiB physical VMEM per TC


# ---------------------------------------------------------------------------
# Kernel 1: tiled dense layer  y = x @ W + b
# ---------------------------------------------------------------------------
def _linear_kernel(x_ref, w_ref, b_ref, o_ref, acc_ref):
    @pl.when(pl.program_id(2) == 0)
    def _():
        acc_ref[...] = jnp.zeros_like(acc_ref)

    acc_ref[...] += jnp.dot(x_ref[...], w_ref[...],
                            preferred_element_type=jnp.float32)

    @pl.when(pl.program_id(2) == pl.num_programs(2) - 1)
    def _():
        o_ref[...] = (acc_ref[...] + b_ref[...].astype(jnp.float32)
                      ).astype(o_ref.dtype)


def _pick_tile(dim, prefs=(512, 256, 128)):
    # TODO(synk): pad non-divisible large dims instead of falling back to the
    # full dimension (only matters for odd sizes; test/typical sizes divide).
    for t in prefs:
        if dim % t == 0:
            return t
    return dim


def pallas_linear(x, w, b, out_dtype=None):
    """x: (M, K), w: (K, N), b: (N,) -> (M, N). Tiled/pipelined MXU matmul."""
    M, K = x.shape
    Kw, N = w.shape
    assert K == Kw and b.shape == (N,)
    out_dtype = x.dtype if out_dtype is None else out_dtype
    tm, tn, tk = _pick_tile(M), _pick_tile(N), _pick_tile(K)
    b2 = b.reshape(1, N).astype(jnp.float32)

    return pl.pallas_call(
        _linear_kernel,
        out_shape=jax.ShapeDtypeStruct((M, N), out_dtype),
        grid_spec=pltpu.PrefetchScalarGridSpec(
            num_scalar_prefetch=0,
            grid=(M // tm, N // tn, K // tk),
            in_specs=[
                pl.BlockSpec((tm, tk), lambda i, j, kk: (i, kk)),
                pl.BlockSpec((tk, tn), lambda i, j, kk: (kk, j)),
                pl.BlockSpec((1, tn), lambda i, j, kk: (0, j)),
            ],
            out_specs=pl.BlockSpec((tm, tn), lambda i, j, kk: (i, j)),
            scratch_shapes=[pltpu.VMEM((tm, tn), jnp.float32)],
        ),
        compiler_params=pltpu.CompilerParams(
            dimension_semantics=("parallel", "parallel", "arbitrary"),
            vmem_limit_bytes=_VMEM_LIMIT),
    )(x, w, b2)


# ---------------------------------------------------------------------------
# Kernel 2: per-batch multi-head scaled dot-product attention.
# Grid = (B,). Each step holds the whole (S, D) / (S, 3D) projection block plus
# the (H, Sq, Sk) weights block resident in VMEM and unrolls over heads with
# static lane slices (no wrapper transposes, no per-head HBM traffic).
# ---------------------------------------------------------------------------
def _attention_head(q, k, v, mask2d, scale):
    # Contract last dims directly (no k.T / XLU relayout). f32 softmax math.
    logits = lax.dot_general(q, k, (((1,), (1,)), ((), ())),
                             preferred_element_type=jnp.float32) * scale
    if mask2d is not None:
        logits = logits + mask2d * (-1.0e9)
    m = jnp.max(logits, axis=-1, keepdims=True)
    p = jnp.exp(logits - m)
    denom = jnp.sum(p, axis=-1, keepdims=True)
    weights = p * pl.reciprocal(denom, approx=True)
    ctx = jnp.dot(weights.astype(v.dtype), v, preferred_element_type=jnp.float32)
    return weights, ctx


def _mha_packed_kernel(*refs, num_heads, depth, model_dim, has_mask, mask_heads):
    # Inputs: qkv (1, S, 3D) [+ mask (1, Hm, Sq, Sk)]; outputs: o (1, S, D),
    # w (1, H, Sq, Sk).
    if has_mask:
        qkv_ref, mask_ref, o_ref, w_ref = refs
    else:
        qkv_ref, o_ref, w_ref = refs
        mask_ref = None
    scale = 1.0 / math.sqrt(depth)
    for h in range(num_heads):
        lo = h * depth
        q = qkv_ref[0, :, lo:lo + depth]
        k = qkv_ref[0, :, model_dim + lo:model_dim + lo + depth]
        v = qkv_ref[0, :, 2 * model_dim + lo:2 * model_dim + lo + depth]
        mask2d = None
        if has_mask:
            mask2d = mask_ref[0, h if mask_heads > 1 else 0]
        weights, ctx = _attention_head(q, k, v, mask2d, scale)
        w_ref[0, h] = weights.astype(w_ref.dtype)
        o_ref[0, :, lo:lo + depth] = ctx.astype(o_ref.dtype)


def _mha_split_kernel(*refs, num_heads, depth, has_mask, mask_heads):
    # Inputs: q (1,Sq,D), k (1,Sk,D), v (1,Sk,D) [+ mask]; outputs as above.
    if has_mask:
        q_ref, k_ref, v_ref, mask_ref, o_ref, w_ref = refs
    else:
        q_ref, k_ref, v_ref, o_ref, w_ref = refs
        mask_ref = None
    scale = 1.0 / math.sqrt(depth)
    for h in range(num_heads):
        lo = h * depth
        q = q_ref[0, :, lo:lo + depth]
        k = k_ref[0, :, lo:lo + depth]
        v = v_ref[0, :, lo:lo + depth]
        mask2d = None
        if has_mask:
            mask2d = mask_ref[0, h if mask_heads > 1 else 0]
        weights, ctx = _attention_head(q, k, v, mask2d, scale)
        w_ref[0, h] = weights.astype(w_ref.dtype)
        o_ref[0, :, lo:lo + depth] = ctx.astype(o_ref.dtype)


def _mask_spec_and_arg(mask, B, in_specs, args):
    """Append the (batch/head-shared) mask spec without replicating it in HBM."""
    Bm, Hm = mask.shape[0], mask.shape[1]
    Sq, Sk = mask.shape[2], mask.shape[3]
    if Bm == B:
        mask_map = lambda b: (b, 0, 0, 0)
    else:  # shared across batch: constant block index -> DMA'd once, stays resident
        mask_map = lambda b: (0, 0, 0, 0)
    in_specs.append(pl.BlockSpec((1, Hm, Sq, Sk), mask_map))
    args.append(mask)
    return Hm


def _pallas_mha_packed(qkv, mask, num_heads, depth):
    B, Sq, threeD = qkv.shape
    D = threeD // 3
    Sk = Sq
    has_mask = mask is not None
    in_specs = [pl.BlockSpec((1, Sq, threeD), lambda b: (b, 0, 0))]
    args = [qkv]
    mask_heads = _mask_spec_and_arg(mask, B, in_specs, args) if has_mask else 1
    kernel = partial(_mha_packed_kernel, num_heads=num_heads, depth=depth,
                     model_dim=D, has_mask=has_mask, mask_heads=mask_heads)
    return pl.pallas_call(
        kernel,
        out_shape=(
            jax.ShapeDtypeStruct((B, Sq, D), qkv.dtype),
            jax.ShapeDtypeStruct((B, num_heads, Sq, Sk), jnp.float32),
        ),
        grid_spec=pltpu.PrefetchScalarGridSpec(
            num_scalar_prefetch=0,
            grid=(B,),
            in_specs=in_specs,
            out_specs=[
                pl.BlockSpec((1, Sq, D), lambda b: (b, 0, 0)),
                pl.BlockSpec((1, num_heads, Sq, Sk), lambda b: (b, 0, 0, 0)),
            ],
        ),
        compiler_params=pltpu.CompilerParams(
            dimension_semantics=("parallel",),
            vmem_limit_bytes=_VMEM_LIMIT),
    )(*args)


def _pallas_mha_split(q_p, k_p, v_p, mask, num_heads, depth):
    B, Sq, D = q_p.shape
    Sk = k_p.shape[1]
    has_mask = mask is not None
    in_specs = [
        pl.BlockSpec((1, Sq, D), lambda b: (b, 0, 0)),
        pl.BlockSpec((1, Sk, D), lambda b: (b, 0, 0)),
        pl.BlockSpec((1, Sk, D), lambda b: (b, 0, 0)),
    ]
    args = [q_p, k_p, v_p]
    mask_heads = _mask_spec_and_arg(mask, B, in_specs, args) if has_mask else 1
    kernel = partial(_mha_split_kernel, num_heads=num_heads, depth=depth,
                     has_mask=has_mask, mask_heads=mask_heads)
    return pl.pallas_call(
        kernel,
        out_shape=(
            jax.ShapeDtypeStruct((B, Sq, D), q_p.dtype),
            jax.ShapeDtypeStruct((B, num_heads, Sq, Sk), jnp.float32),
        ),
        grid_spec=pltpu.PrefetchScalarGridSpec(
            num_scalar_prefetch=0,
            grid=(B,),
            in_specs=in_specs,
            out_specs=[
                pl.BlockSpec((1, Sq, D), lambda b: (b, 0, 0)),
                pl.BlockSpec((1, num_heads, Sq, Sk), lambda b: (b, 0, 0, 0)),
            ],
        ),
        compiler_params=pltpu.CompilerParams(
            dimension_semantics=("parallel",),
            vmem_limit_bytes=_VMEM_LIMIT),
    )(*args)


def _normalize_mask(mask, B, H, Sq, Sk):
    """Normalize to (Bm, Hm, Sq, Sk) float32 with Bm in {1, B}, Hm in {1, H}.
    Batch/head-shared masks stay size-1 on those axes (no B*H replication)."""
    if mask is None:
        return None
    m = jnp.asarray(mask, jnp.float32)
    while m.ndim < 4:
        m = m[None]
    Bm, Hm = m.shape[0], m.shape[1]
    if Bm not in (1, B) or Hm not in (1, H):
        raise ValueError(f"mask leading dims {m.shape[:2]} not broadcastable to {(B, H)}")
    return jnp.broadcast_to(m, (Bm, Hm, Sq, Sk))


# ---------------------------------------------------------------------------
# MultiHeadAttention module (parameters held as plain arrays)
# ---------------------------------------------------------------------------
class MultiHeadAttentionPallas:
    def __init__(self, model_dim, num_heads, key, compute_dtype=jnp.float32):
        assert model_dim % num_heads == 0
        self.model_dim = model_dim
        self.num_heads = num_heads
        self.depth = model_dim // num_heads
        # Set compute_dtype=jnp.bfloat16 on v6e/v7x to halve matmul HBM traffic
        # (softmax math stays f32 inside the kernel).
        self.compute_dtype = compute_dtype

        keys = jax.random.split(key, 8)
        scale = 1.0 / math.sqrt(model_dim)

        def mk_w(kk):
            return jax.random.normal(kk, (model_dim, model_dim), jnp.float32) * scale

        def mk_b(kk):
            return jax.random.normal(kk, (model_dim,), jnp.float32) * 0.01

        self.wq_w, self.wq_b = mk_w(keys[0]), mk_b(keys[1])
        self.wk_w, self.wk_b = mk_w(keys[2]), mk_b(keys[3])
        self.wv_w, self.wv_b = mk_w(keys[4]), mk_b(keys[5])
        self.fc_w, self.fc_b = mk_w(keys[6]), mk_b(keys[7])
        # Fused QKV weight: self-attention reads the activations from HBM once.
        self.wqkv_w = jnp.concatenate([self.wq_w, self.wk_w, self.wv_w], axis=1)
        self.wqkv_b = jnp.concatenate([self.wq_b, self.wk_b, self.wv_b], axis=0)

    def __call__(self, v, k, q, mask=None):
        B, Sq, D = q.shape
        Sk = k.shape[1]
        H, d = self.num_heads, self.depth
        cdt = self.compute_dtype
        out_dtype = q.dtype

        mask_n = _normalize_mask(mask, B, H, Sq, Sk)

        if (q is k) and (k is v):
            # Self-attention: single fused (D, 3D) projection, one x read.
            qkv = pallas_linear(q.reshape(B * Sq, D).astype(cdt),
                                self.wqkv_w.astype(cdt), self.wqkv_b,
                                out_dtype=cdt).reshape(B, Sq, 3 * D)
            attn, attn_w = _pallas_mha_packed(qkv, mask_n, H, d)
        else:
            q_p = pallas_linear(q.reshape(B * Sq, D).astype(cdt),
                                self.wq_w.astype(cdt), self.wq_b,
                                out_dtype=cdt).reshape(B, Sq, D)
            k_p = pallas_linear(k.reshape(B * Sk, D).astype(cdt),
                                self.wk_w.astype(cdt), self.wk_b,
                                out_dtype=cdt).reshape(B, Sk, D)
            v_p = pallas_linear(v.reshape(B * Sk, D).astype(cdt),
                                self.wv_w.astype(cdt), self.wv_b,
                                out_dtype=cdt).reshape(B, Sk, D)
            attn, attn_w = _pallas_mha_split(q_p, k_p, v_p, mask_n, H, d)

        # attn is already in (B, Sq, H*depth) "concat_heads" layout: no transpose.
        out = pallas_linear(attn.reshape(B * Sq, D), self.fc_w.astype(cdt),
                            self.fc_b, out_dtype=out_dtype).reshape(B, Sq, D)
        return out, attn_w


# ---------------------------------------------------------------------------
# Pure-JAX reference for correctness checks
# ---------------------------------------------------------------------------
def _reference(mha, v, k, q, mask=None):
    B, Sq, D = q.shape
    Sk = k.shape[1]
    qp = q.reshape(-1, D) @ mha.wq_w + mha.wq_b
    kp = k.reshape(-1, D) @ mha.wk_w + mha.wk_b
    vp = v.reshape(-1, D) @ mha.wv_w + mha.wv_b
    H, d = mha.num_heads, mha.depth

    def split(x, S):
        return jnp.transpose(x.reshape(B, S, H, d), (0, 2, 1, 3))

    qh, kh, vh = split(qp, Sq), split(kp, Sk), split(vp, Sk)
    logits = jnp.einsum("bhqd,bhkd->bhqk", qh, kh) / jnp.sqrt(jnp.float32(d))
    if mask is not None:
        m = jnp.asarray(mask, jnp.float32)
        while m.ndim < 4:
            m = m[None]
        logits = logits + m * (-1.0e9)
    w = jax.nn.softmax(logits, axis=-1)
    o = jnp.einsum("bhqk,bhkd->bhqd", w, vh)
    o = jnp.transpose(o, (0, 2, 1, 3)).reshape(B, Sq, D)
    out = o.reshape(-1, D) @ mha.fc_w + mha.fc_b
    return out.reshape(B, Sq, D), w


if __name__ == "__main__":
    key = jax.random.PRNGKey(0)
    k_param, k_x, k_q, k_k, k_v = jax.random.split(key, 5)

    batch, seq, model_dim, num_heads = 2, 8, 32, 4
    mha = MultiHeadAttentionPallas(model_dim, num_heads, k_param)

    # --- path 1: self-attention (q is k is v) -> fused QKV projection, no mask ---
    x = jax.random.normal(k_x, (batch, seq, model_dim), jnp.float32)
    out_sa, w_sa = mha(x, x, x, mask=None)
    out_sa = jax.block_until_ready(out_sa)
    w_sa = jax.block_until_ready(w_sa)
    ref_out_sa, ref_w_sa = _reference(mha, x, x, x, None)
    assert out_sa.shape == (batch, seq, model_dim)
    assert w_sa.shape == (batch, num_heads, seq, seq)
    assert jnp.allclose(out_sa, ref_out_sa, atol=5e-3, rtol=5e-3)
    assert jnp.allclose(w_sa, ref_w_sa, atol=5e-3, rtol=5e-3)

    # --- path 2: distinct q/k/v + shared causal mask -> split projections ---
    q = jax.random.normal(k_q, (batch, seq, model_dim), jnp.float32)
    k = jax.random.normal(k_k, (batch, seq, model_dim), jnp.float32)
    v = jax.random.normal(k_v, (batch, seq, model_dim), jnp.float32)
    causal = jnp.triu(jnp.ones((seq, seq), jnp.float32), k=1)  # 1 == masked out
    out_x, w_x = mha(v, k, q, mask=causal)
    out_x = jax.block_until_ready(out_x)
    w_x = jax.block_until_ready(w_x)
    ref_out_x, ref_w_x = _reference(mha, v, k, q, causal)
    assert out_x.shape == (batch, seq, model_dim)
    assert w_x.shape == (batch, num_heads, seq, seq)
    assert jnp.allclose(out_x, ref_out_x, atol=5e-3, rtol=5e-3)
    assert jnp.allclose(w_x, ref_w_x, atol=5e-3, rtol=5e-3)

    print("KERNEL_OK")
</pallas_src>

<mosaic_0001>
module attributes {stable_mosaic.version = 11 : i64} {
  func.func @_linear_kernel(%arg0: i32, %arg1: i32, %arg2: i32, %arg3: memref<16x32xf32, #tpu.memory_space<vmem>>, %arg4: memref<32x96xf32, #tpu.memory_space<vmem>>, %arg5: memref<1x96xf32, #tpu.memory_space<vmem>>, %arg6: memref<16x96xf32, #tpu.memory_space<vmem>>, %arg7: memref<16x96xf32, #tpu.memory_space<vmem>>) attributes {dimension_semantics = [#tpu.dimension_semantics<parallel>, #tpu.dimension_semantics<parallel>, #tpu.dimension_semantics<arbitrary>], iteration_bounds = array<i64: 1, 1, 1>, scalar_prefetch = 0 : i64, scratch_operands = 1 : i64, tpu.core_type = #tpu.core_type<tc>, window_params = [{transform_indices = @transform_0, window_bounds = array<i64: 16, 32>}, {transform_indices = @transform_1, window_bounds = array<i64: 32, 96>}, {transform_indices = @transform_2, window_bounds = array<i64: 1, 96>}, {transform_indices = @transform_3, window_bounds = array<i64: 16, 96>}]} {
    %c0_i32 = arith.constant 0 : i32
    %0 = arith.cmpi eq, %arg2, %c0_i32 : i32
    %1 = arith.extui %0 : i1 to i32
    %c0_i32_0 = arith.constant 0 : i32
    %2 = arith.cmpi ne, %1, %c0_i32_0 : i32
    scf.if %2 {
      %cst_10 = arith.constant 0.000000e+00 : f32
      %12 = vector.broadcast %cst_10 : f32 to vector<16x96xf32>
      %c0_11 = arith.constant 0 : index
      %c0_12 = arith.constant 0 : index
      %13 = vector.load %arg7[%c0_11, %c0_12] : memref<16x96xf32, #tpu.memory_space<vmem>>, vector<16x96xf32>
      tpu.vector_store %arg7[%c0_11, %c0_12], %12 {strides = array<i32>} : memref<16x96xf32, #tpu.memory_space<vmem>>, vector<16x96xf32>,
    } else {
    }
    %c0 = arith.constant 0 : index
    %c0_1 = arith.constant 0 : index
    %3 = vector.load %arg7[%c0, %c0_1] : memref<16x96xf32, #tpu.memory_space<vmem>>, vector<16x96xf32>
    %c0_2 = arith.constant 0 : index
    %c0_3 = arith.constant 0 : index
    %4 = vector.load %arg3[%c0_2, %c0_3] : memref<16x32xf32, #tpu.memory_space<vmem>>, vector<16x32xf32>
    %c0_4 = arith.constant 0 : index
    %c0_5 = arith.constant 0 : index
    %5 = vector.load %arg4[%c0_4, %c0_5] : memref<32x96xf32, #tpu.memory_space<vmem>>, vector<32x96xf32>
    %cst = arith.constant dense<0.000000e+00> : vector<16x96xf32>
    %6 = tpu.matmul %4, %5, %cst {dimension_numbers = #tpu.dot_dimension_numbers<[1], [0], [0], [1], [0, 0, 1, 1], [], []>} : vector<16x32xf32>, vector<32x96xf32>, vector<16x96xf32> -> vector<16x96xf32>
    %7 = arith.addf %3, %6 : vector<16x96xf32>
    %c0_6 = arith.constant 0 : index
    %c0_7 = arith.constant 0 : index
    %8 = vector.load %arg7[%c0_6, %c0_7] : memref<16x96xf32, #tpu.memory_space<vmem>>, vector<16x96xf32>
    tpu.vector_store %arg7[%c0_6, %c0_7], %7 {strides = array<i32>} : memref<16x96xf32, #tpu.memory_space<vmem>>, vector<16x96xf32>,
    %c0_i32_8 = arith.constant 0 : i32
    %9 = arith.cmpi eq, %arg2, %c0_i32_8 : i32
    %10 = arith.extui %9 : i1 to i32
    %c0_i32_9 = arith.constant 0 : i32
    %11 = arith.cmpi ne, %10, %c0_i32_9 : i32
    scf.if %11 {
      %c0_10 = arith.constant 0 : index
      %c0_11 = arith.constant 0 : index
      %12 = vector.load %arg7[%c0_10, %c0_11] : memref<16x96xf32, #tpu.memory_space<vmem>>, vector<16x96xf32>
      %c0_12 = arith.constant 0 : index
      %c0_13 = arith.constant 0 : index
      %13 = vector.load %arg5[%c0_12, %c0_13] : memref<1x96xf32, #tpu.memory_space<vmem>>, vector<1x96xf32>
      %14 = vector.broadcast %13 : vector<1x96xf32> to vector<16x96xf32>
      %15 = arith.addf %12, %14 : vector<16x96xf32>
      %c0_14 = arith.constant 0 : index
      %c0_15 = arith.constant 0 : index
      %16 = vector.load %arg6[%c0_14, %c0_15] : memref<16x96xf32, #tpu.memory_space<vmem>>, vector<16x96xf32>
      tpu.vector_store %arg6[%c0_14, %c0_15], %15 {strides = array<i32>} : memref<16x96xf32, #tpu.memory_space<vmem>>, vector<16x96xf32>,
    } else {
    }
    return
  }
  func.func @transform_0(%arg0: i32, %arg1: i32, %arg2: i32) -> (i32, i32) {
    %c0_i32 = arith.constant 0 : i32
    return %arg0, %arg2 : i32, i32
  }
  func.func @transform_1(%arg0: i32, %arg1: i32, %arg2: i32) -> (i32, i32) {
    %c0_i32 = arith.constant 0 : i32
    return %arg2, %arg1 : i32, i32
  }
  func.func @transform_2(%arg0: i32, %arg1: i32, %arg2: i32) -> (i32, i32) {
    %c0_i32 = arith.constant 0 : i32
    %c0_i32_0 = arith.constant 0 : i32
    return %c0_i32, %arg1 : i32, i32
  }
  func.func @transform_3(%arg0: i32, %arg1: i32, %arg2: i32) -> (i32, i32) {
    %c0_i32 = arith.constant 0 : i32
    return %arg0, %arg1 : i32, i32
  }
}

</mosaic_0001>

<llo_original>
// kernel: tpu_custom_call.1
$region0: #{tpu_custom_call.1}
  #allocation0 [shape = 'u32[]', space=smem, size = 0x4, offset = 0x4, fixed_abs, tag = 'smem constant byte address 0x4 - core index']
  #allocation1 [shape = 'u32[144,128]{1,0:T(1,128)}', space=vmem, size = 0x12000, scoped, tag = 'internal scratch']
  #allocation2 [shape = 'f32[16,96]{1,0:T(8,128)}', space=vmem, size = 0x2000, scoped, tag = 'scratch operand']
  %s0 = inlined_call_operand.hbm [shape: f32[16,32], index: 0, kind: input, shape index: {}]
  %s1 = inlined_call_operand.hbm [shape: f32[32,96], index: 1, kind: input, shape index: {}]
  %s2 = inlined_call_operand.vmem [shape: f32[1,96], index: 2, kind: input, shape index: {}]
  %s3 = inlined_call_operand.hbm [shape: f32[16,96], index: 3, kind: output, shape index: {}]
  %s4 = sld [smem:[#allocation0]]
  $region38: #{tpu_custom_call.1} parent=0
    _
  %s6 = ssub.s32 1, %s4
  %s7 = scalar_select 0, %s6, %s4
  $region1: #{tpu_custom_call.1} parent=0
    #allocation3 [shape = 'u8[8192]{0}', space=vmem, size = 0x2000, scoped, tag = 'input window, operand 0, single buffered']
    #allocation4 [shape = 's32[1]{0}', space=sflag, size = 0x4, scoped, tag = 'scoped memory for tpu_custom_call.1']
    #allocation5 [shape = 's32[1]{0}', space=sflag, size = 0x4, scoped, tag = 'scoped memory for tpu_custom_call.1']
    #allocation6 [shape = 'u8[16384]{0}', space=vmem, size = 0x4000, scoped, tag = 'input window, operand 1, single buffered']
    #allocation7 [shape = 's32[1]{0}', space=sflag, size = 0x4, scoped, tag = 'scoped memory for tpu_custom_call.1']
    #allocation8 [shape = 'u8[8192]{0}', space=vmem, size = 0x2000, scoped, tag = 'output window, operand 0, single buffered']
    %8 = vsyncpa [#allocation4], 0
    %9 = vsyncpa [#allocation7], 0
    %10 = vsyncpa [#allocation5], 0
    // Predicated region
    $region2: #{tpu_custom_call.1} parent=1 // pred_check
      _
    $region3: #{tpu_custom_call.1} parent=1 // pred_check_branch
      %12 = sbr.rel (0) target = $region5
    $region4: #{tpu_custom_call.1} parent=1 // pred_region
      %s14 = ssub.s32 256, 256
      %15 = vsyncadd [#allocation4], %s14
      %s16 = sshll.u32 [#allocation3], 4
      %s17 = int_to_ptr.vmem [resolvable:$true] %s16
      %22 = dma.hbm_to_vmem [thread:$0]  %s0, 256, %s17, [#allocation4], 128, 128, 8
    $region5: #{tpu_custom_call.1} parent=1 // pred_fallthru
      _
    // Predicated region
    $region6: #{tpu_custom_call.1} parent=1 // pred_check
      _
    $region7: #{tpu_custom_call.1} parent=1 // pred_check_branch
      %24 = sbr.rel (0) target = $region9
    $region8: #{tpu_custom_call.1} parent=1 // pred_region
      %s26 = ssub.s32 512, 512
      %27 = vsyncadd [#allocation7], %s26
      %s28 = sshll.u32 [#allocation6], 4
      %s29 = int_to_ptr.vmem [resolvable:$true] %s28
      %34 = dma.hbm_to_vmem [thread:$0]  %s1, 512, %s29, [#allocation7], 128, 128, 8
    $region9: #{tpu_custom_call.1} parent=1 // pred_fallthru
      _
    // Predicated region
    $region10: #{tpu_custom_call.1} parent=1 // pred_check
      _
    $region11: #{tpu_custom_call.1} parent=1 // pred_check_branch
      %36 = sbr.rel (0) target = $region13
    $region12: #{tpu_custom_call.1} parent=1 // pred_region
      _
    $region13: #{tpu_custom_call.1} parent=1 // pred_fallthru
      _
    // Predicated region
    $region14: #{tpu_custom_call.1} parent=1 // pred_check
      _
    $region15: #{tpu_custom_call.1} parent=1 // pred_check_branch
      %38 = sbr.rel (0) target = $region17
    $region16: #{tpu_custom_call.1} parent=1 // pred_region
      %39 = dma.done [#allocation4], 256
    $region17: #{tpu_custom_call.1} parent=1 // pred_fallthru
      _
    // Predicated region
    $region18: #{tpu_custom_call.1} parent=1 // pred_check
      _
    $region19: #{tpu_custom_call.1} parent=1 // pred_check_branch
      %41 = sbr.rel (0) target = $region21
    $region20: #{tpu_custom_call.1} parent=1 // pred_region
      %42 = dma.done [#allocation7], 512
    $region21: #{tpu_custom_call.1} parent=1 // pred_fallthru
      _
    %p43 = scmp.eq.s32.totalorder 0, 0
    // Predicated region
    $region22: #{tpu_custom_call.1} parent=1 // pred_check
      %p44 = pneg %p43
    $region23: #{tpu_custom_call.1} parent=1 // pred_check_branch
      %46 = sbr.rel (%p44) target = $region25
    $region24: #{tpu_custom_call.1} parent=1 // pred_region
      %vm47 = vcmask 785408
      %48 = vst.msk [vmem:[#allocation2] sm:$0xff] %vm47, 0.0
      %49 = vst.msk [vmem:[#allocation2 + $0x8] sm:$0xff] %vm47, 0.0
    $region25: #{tpu_custom_call.1} parent=1 // pred_fallthru
      _
    %v50 = vld [vmem:[#allocation2] sm:$0xff]
    %v51 = vld [vmem:[#allocation2 + $0x8] sm:$0xff]
    %v52 = vld [vmem:[#allocation3] sm:$0xff]
    %v53 = vld [vmem:[#allocation3 + $0x8] sm:$0xff]
    %v54 = vld [vmem:[#allocation6] sm:$0xff]
    %v55 = vld [vmem:[#allocation6 + $0x8] sm:$0xff]
    %v56 = vld [vmem:[#allocation6 + $0x10] sm:$0xff]
    %v57 = vld [vmem:[#allocation6 + $0x18] sm:$0xff]
    %vm58 = vcmask 261120
    %v60 = vsel %vm58, %v52, 0
    %v63 = vsel %vm58, %v53, 0
    %65 = vmatprep.subr.mxu0 0.0
    %66 = vmatpush1.msra.mxu0 %v54
    %67 = vmatprep.subr.mxu0 0.0
    %68 = vmatpush1.msra.mxu0 %v55
    %69 = vmatprep.subr.mxu0 0.0
    %70 = vmatpush1.msra.mxu0 %v56
    %71 = vmatprep.subr.mxu0 0.0
    %72 = vmatpush1.msra.mxu0 %v57
    %73 = vmatprep.subr.mxu0 0.0
    %74 = vmatpush1.msra.mxu0 0.0
    %75 = vmatprep.subr.mxu0 0.0
    %76 = vmatpush1.msra.mxu0 0.0
    %77 = vmatprep.subr.mxu0 0.0
    %78 = vmatpush1.msra.mxu0 0.0
    %79 = vmatprep.subr.mxu0 0.0
    %80 = vmatpush1.msra.mxu0 0.0
    %81 = vmatprep.subr.mxu0 0.0
    %82 = vmatpush1.msra.mxu0 0.0
    %83 = vmatprep.subr.mxu0 0.0
    %84 = vmatpush1.msra.mxu0 0.0
    %85 = vmatprep.subr.mxu0 0.0
    %86 = vmatpush1.msra.mxu0 0.0
    %87 = vmatprep.subr.mxu0 0.0
    %88 = vmatpush1.msra.mxu0 0.0
    %89 = vmatprep.subr.mxu0 0.0
    %90 = vmatpush1.msra.mxu0 0.0
    %91 = vmatprep.subr.mxu0 0.0
    %92 = vmatpush1.msra.mxu0 0.0
    %93 = vmatprep.subr.mxu0 0.0
    %94 = vmatpush1.msra.mxu0 0.0
    %95 = vmatprep.subr.mxu0 0.0
    %96 = vmatpush1.msra.mxu0 0.0
    %97 = vmatprep.subr.mxu0 0.0
    %98 = vmatpush1.msra.mxu0 0.0
    %99 = vmatprep.subr.mxu0 0.0
    %100 = vmatpush1.msra.mxu0 0.0
    %101 = vmatprep.subr.mxu0 0.0
    %102 = vmatpush1.msra.mxu0 0.0
    %103 = vmatprep.subr.mxu0 0.0
    %104 = vmatpush1.msra.mxu0 0.0
    %105 = vmatprep.subr.mxu0 0.0
    %106 = vmatpush1.msra.mxu0 0.0
    %107 = vmatprep.subr.mxu0 0.0
    %108 = vmatpush1.msra.mxu0 0.0
    %109 = vmatprep.subr.mxu0 0.0
    %110 = vmatpush1.msra.mxu0 0.0
    %111 = vmatprep.subr.mxu0 0.0
    %112 = vmatpush1.msra.mxu0 0.0
    %113 = vmatprep.subr.mxu0 0.0
    %114 = vmatpush1.msra.mxu0 0.0
    %115 = vmatprep.subr.mxu0 0.0
    %116 = vmatpush1.msra.mxu0 0.0
    %117 = vmatprep.subr.mxu0 0.0
    %118 = vmatpush1.msra.mxu0 0.0
    %119 = vmatprep.subr.mxu0 0.0
    %120 = vmatpush1.msra.mxu0 0.0
    %121 = vmatprep.subr.mxu0 0.0
    %122 = vmatpush1.msra.mxu0 0.0
    %123 = vmatprep.subr.mxu0 0.0
    %124 = vmatpush1.msra.mxu0 0.0
    %125 = vmatprep.subr.mxu0 0.0
    %126 = vmatpush1.msra.mxu0 0.0
    %127 = vmatprep.subr.mxu0 0.0
    %128 = vmatpush1.msra.mxu0 0.0
    %129 = vmatprep.mubr.f32.mxu0 0.0
    %130 = vmatmul.mubr.f32.gmra.mrb[0].mxu0 %v60
    %v131 = vpop.f32.mrb[0].mxu0
    %v132 = vadd.f32 0.0, %v131
    %v133 = vpop.f32.mrb[0].mxu0
    %134 = vmatprep.mubr.f32.mxu0 0.0
    %135 = vmatmul.mubr.f32.gmra.mrb[0].mxu0 %v63
    %v136 = vpop.f32.mrb[0].mxu0
    %v137 = vadd.f32 0.0, %v136
    %v138 = vpop.f32.mrb[0].mxu0
    %139 = vdwg.mxu0
    %v140 = vadd.f32 %v50, %v132
    %v141 = vadd.f32 %v51, %v137
    %vm142 = vcmask 785408
    %143 = vst.msk [vmem:[#allocation2] sm:$0xff] %vm142, %v140
    %144 = vst.msk [vmem:[#allocation2 + $0x8] sm:$0xff] %vm142, %v141
    // Predicated region
    $region26: #{tpu_custom_call.1} parent=1 // pred_check
      %p145 = pneg %p43
    $region27: #{tpu_custom_call.1} parent=1 // pred_check_branch
      %147 = sbr.rel (%p145) target = $region29
    $region28: #{tpu_custom_call.1} parent=1 // pred_region
      %v148 = vld [vmem:[#allocation2] sm:$0xff]
      %v149 = vld [vmem:[#allocation2 + $0x8] sm:$0xff]
      %v150 = vld [vmem:[%s2] sm:$0x1]
      %v152 = vlaneseq
      %v153 = vshrl.u32 %v152, 7
      %v154 = vsub.s32 0, %v153
      %v155 = vrot.slane %v150, %v154
      %v157 = vadd.f32 %v148, %v155
      %v158 = vadd.f32 %v149, %v155
      %159 = vst.msk [vmem:[#allocation8] sm:$0xff] %vm142, %v157
      %160 = vst.msk [vmem:[#allocation8 + $0x8] sm:$0xff] %vm142, %v158
    $region29: #{tpu_custom_call.1} parent=1 // pred_fallthru
      _
    // Predicated region
    $region30: #{tpu_custom_call.1} parent=1 // pred_check
      _
    $region31: #{tpu_custom_call.1} parent=1 // pred_check_branch
      %162 = sbr.rel (0) target = $region33
    $region32: #{tpu_custom_call.1} parent=1 // pred_region
      %s164 = ssub.s32 256, 256
      %165 = vsyncadd [#allocation5], %s164
      %s166 = sshll.u32 [#allocation8], 4
      %s167 = int_to_ptr.vmem [resolvable:$true] %s166
      %172 = dma.vmem_to_hbm [thread:$0]  %s167, 256, %s3, [#allocation5], 128, 128, 8
    $region33: #{tpu_custom_call.1} parent=1 // pred_fallthru
      _
    // Predicated region
    $region34: #{tpu_custom_call.1} parent=1 // pred_check
      _
    $region35: #{tpu_custom_call.1} parent=1 // pred_check_branch
      %174 = sbr.rel (0) target = $region37
    $region36: #{tpu_custom_call.1} parent=1 // pred_region
      %175 = dma.done [#allocation5], 256
    $region37: #{tpu_custom_call.1} parent=1 // pred_fallthru
      _
    %176 = vsyncpa [#allocation4], 1
    %177 = vsyncpa [#allocation7], 1
    %178 = vsyncpa [#allocation5], 1

</llo_original>
